<compile_context>
chip_gen: v7x
topology: tpu7x:2x2x1
jax: 0.10.0
libtpu: 0.0.40
codegen_flags: <defaults>
</compile_context>

<pallas_src>
import functools

import jax
import jax.numpy as jnp
from jax.experimental import pallas as pl
from jax.experimental.pallas import tpu as pltpu

_EPS = 1e-5       # PyTorch nn.LayerNorm default eps
_SLOPE = 0.2      # F.leaky_relu negative_slope
_MAX_TILE_B = 256 # worth sweeping 512 on v6e/v5e (128 MiB physical VMEM)


def _round_up(x, m):
    return ((x + m - 1) // m) * m


def residual_block_kernel(x_ref, w1ws_ref, vec_ref, w2_ref, o_ref, *, n_real, n_pad):
    """One batch tile: fused (lin1 | shortcut) -> LN -> lrelu -> lin2 -> LN -> +sc -> lrelu."""
    xb = x_ref[...]                                   # (TILE_B, in_pad) bf16, streamed

    vec = vec_ref[...]                                # (8, out_pad) f32 param slab
    b1, bs = vec[0:1, :], vec[1:2, :]
    g1, be1 = vec[2:3, :], vec[3:4, :]
    b2, g2, be2 = vec[4:5, :], vec[5:6, :], vec[6:7, :]

    # Fused first MXU pass: x @ [W1 | Ws] gives lin1(x) and shortcut(x) together.
    hs = jnp.dot(xb, w1ws_ref[...], preferred_element_type=jnp.float32)
    h = hs[:, :n_pad] + b1
    sc = hs[:, n_pad:] + bs

    if n_real == n_pad:
        # No feature padding: plain (numerically nicer) two-pass LayerNorm.
        def layer_norm(t, gamma, beta):
            mu = jnp.mean(t, axis=-1, keepdims=True)
            d = t - mu
            var = jnp.mean(d * d, axis=-1, keepdims=True)
            return d * jax.lax.rsqrt(var + _EPS) * gamma + beta
    else:
        inv_n = 1.0 / float(n_real)

        def layer_norm(t, gamma, beta):
            # Padded feature lanes of t are exactly 0 by construction (zero-padded x
            # columns, weight rows/cols and biases), so plain sums / n_real give the
            # real mean and E[x^2]; padded gamma/beta are 0 so padded output lanes
            # stay 0.  Removes the per-element mask passes and the per-step iota.
            mu = jnp.sum(t, axis=-1, keepdims=True) * inv_n
            ex2 = jnp.sum(t * t, axis=-1, keepdims=True) * inv_n
            var = jnp.maximum(ex2 - mu * mu, 0.0)
            return (t - mu) * jax.lax.rsqrt(var + _EPS) * gamma + beta

    def leaky_relu(t):
        return jnp.where(t > 0, t, _SLOPE * t)

    h = leaky_relu(layer_norm(h, g1, be1))
    h = jnp.dot(h.astype(jnp.bfloat16), w2_ref[...],
                preferred_element_type=jnp.float32) + b2
    h = layer_norm(h, g2, be2)
    o_ref[...] = leaky_relu(h + sc).astype(o_ref.dtype)


def make_params(key, in_features, out_features):
    """Deterministic PyTorch-equivalent params; Linear weights pre-transposed to (in, out)."""
    ks = jax.random.split(key, 6)
    s1 = 1.0 / jnp.sqrt(in_features)
    s2 = 1.0 / jnp.sqrt(out_features)
    w1 = jax.random.uniform(ks[0], (in_features, out_features), jnp.float32, -s1, s1)
    b1 = jax.random.uniform(ks[1], (1, out_features), jnp.float32, -s1, s1)
    w2 = jax.random.uniform(ks[2], (out_features, out_features), jnp.float32, -s2, s2)
    b2 = jax.random.uniform(ks[3], (1, out_features), jnp.float32, -s2, s2)
    ws = jax.random.uniform(ks[4], (in_features, out_features), jnp.float32, -s1, s1)
    bs = jax.random.uniform(ks[5], (1, out_features), jnp.float32, -s1, s1)
    g1 = jnp.ones((1, out_features), jnp.float32)
    be1 = jnp.zeros((1, out_features), jnp.float32)
    g2 = jnp.ones((1, out_features), jnp.float32)
    be2 = jnp.zeros((1, out_features), jnp.float32)
    return (w1, b1, g1, be1, w2, b2, g2, be2, ws, bs)


def pack_params(params):
    """One-time packing: zero-pad feature dims to lane multiples (128), fuse [W1|Ws]
    (bf16), and stack all (1, out) vectors into one resident (8, out_pad) f32 slab.
    NOTE: LayerNorm correctness in the kernel relies on this zero padding."""
    (w1, b1, g1, be1, w2, b2, g2, be2, ws, bs) = params
    in_f, out_f = w1.shape
    in_pad = _round_up(in_f, 128)
    out_pad = _round_up(out_f, 128)

    def pad2(a, rows, cols):
        return jnp.pad(a, ((0, rows - a.shape[0]), (0, cols - a.shape[1])))

    # rows: 0=b1 1=bs 2=gamma1 3=beta1 4=b2 5=gamma2 6=beta2 7=unused
    vec = jnp.concatenate(
        [pad2(v, 1, out_pad) for v in (b1, bs, g1, be1, b2, g2, be2)]
        + [jnp.zeros((1, out_pad), jnp.float32)],
        axis=0).astype(jnp.float32)

    return dict(
        w1ws=jnp.concatenate(
            [pad2(w1, in_pad, out_pad), pad2(ws, in_pad, out_pad)],
            axis=1).astype(jnp.bfloat16),
        w2=pad2(w2, out_pad, out_pad).astype(jnp.bfloat16),
        vec=vec,
    )


@functools.partial(jax.jit, static_argnames=("in_features", "out_features"))
def residual_block(x, packed, in_features, out_features):
    batch, x_feat = x.shape
    assert x_feat == in_features, "x width must match the width pack_params was built for"
    in_pad, two_out_pad = packed["w1ws"].shape
    out_pad = two_out_pad // 2
    assert in_pad == _round_up(in_features, 128), "packed params built with a different in_features"
    assert out_pad == _round_up(out_features, 128), "packed params built with a different out_features"

    # Batch tiling: once batch > 16, use at least 2 (and an even number of) tiles so
    # the "parallel" axis shards evenly across both v7x TensorCores; tile rows are a
    # multiple of 16 (bf16 sublane packing) and capped at _MAX_TILE_B to bound VMEM.
    if batch <= 16:
        tile_b = _round_up(batch, 8)                  # single tile == full array
    else:
        num_tiles = max(2, 2 * pl.cdiv(batch, 2 * _MAX_TILE_B))
        tile_b = min(_MAX_TILE_B, _round_up(pl.cdiv(batch, num_tiles), 16))
    batch_pad = _round_up(batch, tile_b)

    # Stream x as bf16: the pad already materializes a copy here, so the cast is free,
    # and it halves the streamed DMA + x double buffer.
    xp = jnp.pad(x.astype(jnp.bfloat16),
                 ((0, batch_pad - batch), (0, in_pad - in_features)))

    kernel = functools.partial(residual_block_kernel,
                               n_real=out_features, n_pad=out_pad)

    resident = lambda i: (0, 0)   # same block every step -> stays in VMEM
    buf1 = pl.Buffered(1)         # resident operands: no dead second buffer

    # VMEM budget from actual buffer sizes (x/out double-buffered, weights single).
    est_bytes = (2 * tile_b * in_pad * 2          # x: 2 bufs, bf16
                 + in_pad * two_out_pad * 2       # [W1|Ws]: 1 buf, bf16
                 + out_pad * out_pad * 2          # W2: 1 buf, bf16
                 + 8 * out_pad * 4                # vector slab: 1 buf, f32
                 + 2 * tile_b * out_pad * 4)      # out: 2 bufs, f32
    vmem_limit = int(min(128 * 1024 * 1024,
                         max(32 * 1024 * 1024, 2 * est_bytes + (4 << 20))))
    # TODO(synk): for in_pad/out_pad >= ~2048 the resident bf16 weights approach v7x's
    # 64 MiB VMEM; add a second grid axis tiling the output (N) dim of [W1|Ws] / W2
    # there instead of keeping all weights resident.  On v5e, consider
    # pipeline_mode=pl.Buffered(3) on the x spec to hide the slower HBM stream.

    out = pl.pallas_call(
        kernel,
        out_shape=jax.ShapeDtypeStruct((batch_pad, out_pad), jnp.float32),
        grid_spec=pltpu.PrefetchScalarGridSpec(
            num_scalar_prefetch=0,
            grid=(batch_pad // tile_b,),
            in_specs=[
                pl.BlockSpec((tile_b, in_pad), lambda i: (i, 0)),      # x batch tile (bf16)
                pl.BlockSpec((in_pad, two_out_pad), resident,
                             pipeline_mode=buf1),                      # [W1 | Ws] (bf16)
                pl.BlockSpec((8, out_pad), resident,
                             pipeline_mode=buf1),                      # b1,bs,g1,be1,b2,g2,be2
                pl.BlockSpec((out_pad, out_pad), resident,
                             pipeline_mode=buf1),                      # W2 (bf16)
            ],
            out_specs=pl.BlockSpec((tile_b, out_pad), lambda i: (i, 0)),
        ),
        compiler_params=pltpu.CompilerParams(
            dimension_semantics=("parallel",),       # batch tiles -> both TCs on v7x
            vmem_limit_bytes=vmem_limit,
        ),
    )(xp, packed["w1ws"], packed["vec"], packed["w2"])

    return out[:batch, :out_features]


def residual_block_ref(x, params):
    """Plain-JAX f32 reference (matches the PyTorch forward)."""
    (w1, b1, g1, be1, w2, b2, g2, be2, ws, bs) = params

    def ln(h, g, b):
        mu = jnp.mean(h, axis=-1, keepdims=True)
        var = jnp.mean((h - mu) ** 2, axis=-1, keepdims=True)
        return (h - mu) * jax.lax.rsqrt(var + _EPS) * g + b

    def lrelu(h):
        return jnp.where(h > 0, h, _SLOPE * h)

    h = lrelu(ln(x @ w1 + b1, g1, be1))
    h = ln(h @ w2 + b2, g2, be2)
    return lrelu(h + (x @ ws + bs))


if __name__ == "__main__":
    key = jax.random.PRNGKey(0)
    kx, kp = jax.random.split(key)

    batch, in_features, out_features = 8, 32, 64
    x = jax.random.normal(kx, (batch, in_features), jnp.float32)
    params = make_params(kp, in_features, out_features)
    packed = pack_params(params)

    out = residual_block(x, packed, in_features, out_features)
    out = jax.block_until_ready(out)

    ref = residual_block_ref(x, params)
    assert out.shape == (batch, out_features)
    # bf16 MXU operands with f32 accumulation -> few-percent tolerance vs pure-f32 ref.
    assert jnp.allclose(out, ref, rtol=5e-2, atol=5e-2), "mismatch vs reference"

    print("KERNEL_OK")
</pallas_src>

<mosaic_0001>
module attributes {stable_mosaic.version = 11 : i64} {
  func.func @residual_block_kernel(%arg0: i32, %arg1: memref<8x128xbf16, #tpu.memory_space<vmem>>, %arg2: memref<128x256xbf16, #tpu.memory_space<vmem>>, %arg3: memref<8x128xf32, #tpu.memory_space<vmem>>, %arg4: memref<128x128xbf16, #tpu.memory_space<vmem>>, %arg5: memref<8x128xf32, #tpu.memory_space<vmem>>) attributes {dimension_semantics = [#tpu.dimension_semantics<parallel>], iteration_bounds = array<i64: 1>, scalar_prefetch = 0 : i64, scratch_operands = 0 : i64, tpu.core_type = #tpu.core_type<tc>, window_params = [{transform_indices = @transform_0, window_bounds = array<i64: 8, 128>}, {pipeline_mode = #tpu.pipeline_mode<synchronous>, transform_indices = @transform_1, window_bounds = array<i64: 128, 256>}, {pipeline_mode = #tpu.pipeline_mode<synchronous>, transform_indices = @transform_2, window_bounds = array<i64: 8, 128>}, {pipeline_mode = #tpu.pipeline_mode<synchronous>, transform_indices = @transform_3, window_bounds = array<i64: 128, 128>}, {transform_indices = @transform_4, window_bounds = array<i64: 8, 128>}]} {
    %c0 = arith.constant 0 : index
    %c0_0 = arith.constant 0 : index
    %0 = vector.load %arg1[%c0, %c0_0] : memref<8x128xbf16, #tpu.memory_space<vmem>>, vector<8x128xbf16>
    %c0_1 = arith.constant 0 : index
    %c0_2 = arith.constant 0 : index
    %1 = vector.load %arg3[%c0_1, %c0_2] : memref<8x128xf32, #tpu.memory_space<vmem>>, vector<8x128xf32>
    %2 = vector.extract_strided_slice %1 {offsets = [0, 0], sizes = [1, 128], strides = [1, 1]} : vector<8x128xf32> to vector<1x128xf32>
    %3 = vector.extract_strided_slice %1 {offsets = [1, 0], sizes = [1, 128], strides = [1, 1]} : vector<8x128xf32> to vector<1x128xf32>
    %4 = vector.extract_strided_slice %1 {offsets = [2, 0], sizes = [1, 128], strides = [1, 1]} : vector<8x128xf32> to vector<1x128xf32>
    %5 = vector.extract_strided_slice %1 {offsets = [3, 0], sizes = [1, 128], strides = [1, 1]} : vector<8x128xf32> to vector<1x128xf32>
    %6 = vector.extract_strided_slice %1 {offsets = [4, 0], sizes = [1, 128], strides = [1, 1]} : vector<8x128xf32> to vector<1x128xf32>
    %7 = vector.extract_strided_slice %1 {offsets = [5, 0], sizes = [1, 128], strides = [1, 1]} : vector<8x128xf32> to vector<1x128xf32>
    %8 = vector.extract_strided_slice %1 {offsets = [6, 0], sizes = [1, 128], strides = [1, 1]} : vector<8x128xf32> to vector<1x128xf32>
    %c0_3 = arith.constant 0 : index
    %c0_4 = arith.constant 0 : index
    %9 = vector.load %arg2[%c0_3, %c0_4] : memref<128x256xbf16, #tpu.memory_space<vmem>>, vector<128x256xbf16>
    %cst = arith.constant dense<0.000000e+00> : vector<8x256xf32>
    %10 = tpu.matmul %0, %9, %cst {dimension_numbers = #tpu.dot_dimension_numbers<[1], [0], [0], [1], [0, 0, 1, 1], [], []>} : vector<8x128xbf16>, vector<128x256xbf16>, vector<8x256xf32> -> vector<8x256xf32>
    %11 = vector.extract_strided_slice %10 {offsets = [0, 0], sizes = [8, 128], strides = [1, 1]} : vector<8x256xf32> to vector<8x128xf32>
    %12 = vector.broadcast %2 : vector<1x128xf32> to vector<8x128xf32>
    %13 = arith.addf %11, %12 : vector<8x128xf32>
    %14 = vector.extract_strided_slice %10 {offsets = [0, 128], sizes = [8, 128], strides = [1, 1]} : vector<8x256xf32> to vector<8x128xf32>
    %15 = vector.broadcast %3 : vector<1x128xf32> to vector<8x128xf32>
    %16 = arith.addf %14, %15 : vector<8x128xf32>
    %cst_5 = arith.constant dense<0.000000e+00> : vector<8xf32>
    %17 = vector.multi_reduction <add>, %13, %cst_5 [1] : vector<8x128xf32> to vector<8xf32>
    %18 = vector.shape_cast %17 : vector<8xf32> to vector<8x1xf32>
    %cst_6 = arith.constant 1.562500e-02 : f32
    %19 = vector.broadcast %cst_6 : f32 to vector<8x1xf32>
    %20 = arith.mulf %18, %19 : vector<8x1xf32>
    %21 = arith.mulf %13, %13 : vector<8x128xf32>
    %cst_7 = arith.constant dense<0.000000e+00> : vector<8xf32>
    %22 = vector.multi_reduction <add>, %21, %cst_7 [1] : vector<8x128xf32> to vector<8xf32>
    %23 = vector.shape_cast %22 : vector<8xf32> to vector<8x1xf32>
    %cst_8 = arith.constant 1.562500e-02 : f32
    %24 = vector.broadcast %cst_8 : f32 to vector<8x1xf32>
    %25 = arith.mulf %23, %24 : vector<8x1xf32>
    %26 = arith.mulf %20, %20 : vector<8x1xf32>
    %27 = arith.subf %25, %26 : vector<8x1xf32>
    %cst_9 = arith.constant 0.000000e+00 : f32
    %28 = vector.broadcast %cst_9 : f32 to vector<8x1xf32>
    %29 = arith.maximumf %27, %28 : vector<8x1xf32>
    %30 = vector.broadcast %20 : vector<8x1xf32> to vector<8x128xf32>
    %31 = arith.subf %13, %30 : vector<8x128xf32>
    %cst_10 = arith.constant 9.99999974E-6 : f32
    %32 = vector.broadcast %cst_10 : f32 to vector<8x1xf32>
    %33 = arith.addf %29, %32 : vector<8x1xf32>
    %34 = math.rsqrt %33 : vector<8x1xf32>
    %35 = vector.broadcast %34 : vector<8x1xf32> to vector<8x128xf32>
    %36 = arith.mulf %31, %35 : vector<8x128xf32>
    %37 = vector.broadcast %4 : vector<1x128xf32> to vector<8x128xf32>
    %38 = arith.mulf %36, %37 : vector<8x128xf32>
    %39 = vector.broadcast %5 : vector<1x128xf32> to vector<8x128xf32>
    %40 = arith.addf %38, %39 : vector<8x128xf32>
    %cst_11 = arith.constant 0.000000e+00 : f32
    %41 = vector.broadcast %cst_11 : f32 to vector<8x128xf32>
    %42 = arith.cmpf ogt, %40, %41 : vector<8x128xf32>
    %cst_12 = arith.constant 2.000000e-01 : f32
    %43 = vector.broadcast %cst_12 : f32 to vector<8x128xf32>
    %44 = arith.mulf %43, %40 : vector<8x128xf32>
    %45 = arith.select %42, %40, %44 : vector<8x128xi1>, vector<8x128xf32>
    %46 = arith.truncf %45 : vector<8x128xf32> to vector<8x128xbf16>
    %c0_13 = arith.constant 0 : index
    %c0_14 = arith.constant 0 : index
    %47 = vector.load %arg4[%c0_13, %c0_14] : memref<128x128xbf16, #tpu.memory_space<vmem>>, vector<128x128xbf16>
    %cst_15 = arith.constant dense<0.000000e+00> : vector<8x128xf32>
    %48 = tpu.matmul %46, %47, %cst_15 {dimension_numbers = #tpu.dot_dimension_numbers<[1], [0], [0], [1], [0, 0, 1, 1], [], []>} : vector<8x128xbf16>, vector<128x128xbf16>, vector<8x128xf32> -> vector<8x128xf32>
    %49 = vector.broadcast %6 : vector<1x128xf32> to vector<8x128xf32>
    %50 = arith.addf %48, %49 : vector<8x128xf32>
    %cst_16 = arith.constant dense<0.000000e+00> : vector<8xf32>
    %51 = vector.multi_reduction <add>, %50, %cst_16 [1] : vector<8x128xf32> to vector<8xf32>
    %52 = vector.shape_cast %51 : vector<8xf32> to vector<8x1xf32>
    %cst_17 = arith.constant 1.562500e-02 : f32
    %53 = vector.broadcast %cst_17 : f32 to vector<8x1xf32>
    %54 = arith.mulf %52, %53 : vector<8x1xf32>
    %55 = arith.mulf %50, %50 : vector<8x128xf32>
    %cst_18 = arith.constant dense<0.000000e+00> : vector<8xf32>
    %56 = vector.multi_reduction <add>, %55, %cst_18 [1] : vector<8x128xf32> to vector<8xf32>
    %57 = vector.shape_cast %56 : vector<8xf32> to vector<8x1xf32>
    %cst_19 = arith.constant 1.562500e-02 : f32
    %58 = vector.broadcast %cst_19 : f32 to vector<8x1xf32>
    %59 = arith.mulf %57, %58 : vector<8x1xf32>
    %60 = arith.mulf %54, %54 : vector<8x1xf32>
    %61 = arith.subf %59, %60 : vector<8x1xf32>
    %cst_20 = arith.constant 0.000000e+00 : f32
    %62 = vector.broadcast %cst_20 : f32 to vector<8x1xf32>
    %63 = arith.maximumf %61, %62 : vector<8x1xf32>
    %64 = vector.broadcast %54 : vector<8x1xf32> to vector<8x128xf32>
    %65 = arith.subf %50, %64 : vector<8x128xf32>
    %cst_21 = arith.constant 9.99999974E-6 : f32
    %66 = vector.broadcast %cst_21 : f32 to vector<8x1xf32>
    %67 = arith.addf %63, %66 : vector<8x1xf32>
    %68 = math.rsqrt %67 : vector<8x1xf32>
    %69 = vector.broadcast %68 : vector<8x1xf32> to vector<8x128xf32>
    %70 = arith.mulf %65, %69 : vector<8x128xf32>
    %71 = vector.broadcast %7 : vector<1x128xf32> to vector<8x128xf32>
    %72 = arith.mulf %70, %71 : vector<8x128xf32>
    %73 = vector.broadcast %8 : vector<1x128xf32> to vector<8x128xf32>
    %74 = arith.addf %72, %73 : vector<8x128xf32>
    %75 = arith.addf %74, %16 : vector<8x128xf32>
    %cst_22 = arith.constant 0.000000e+00 : f32
    %76 = vector.broadcast %cst_22 : f32 to vector<8x128xf32>
    %77 = arith.cmpf ogt, %75, %76 : vector<8x128xf32>
    %cst_23 = arith.constant 2.000000e-01 : f32
    %78 = vector.broadcast %cst_23 : f32 to vector<8x128xf32>
    %79 = arith.mulf %78, %75 : vector<8x128xf32>
    %80 = arith.select %77, %75, %79 : vector<8x128xi1>, vector<8x128xf32>
    %c0_24 = arith.constant 0 : index
    %c0_25 = arith.constant 0 : index
    %81 = vector.load %arg5[%c0_24, %c0_25] : memref<8x128xf32, #tpu.memory_space<vmem>>, vector<8x128xf32>
    tpu.vector_store %arg5[%c0_24, %c0_25], %80 {strides = array<i32>} : memref<8x128xf32, #tpu.memory_space<vmem>>, vector<8x128xf32>,
    return
  }
  func.func @transform_0(%arg0: i32) -> (i32, i32) {
    %c0_i32 = arith.constant 0 : i32
    %c0_i32_0 = arith.constant 0 : i32
    return %arg0, %c0_i32 : i32, i32
  }
  func.func @transform_1(%arg0: i32) -> (i32, i32) {
    %c0_i32 = arith.constant 0 : i32
    %c0_i32_0 = arith.constant 0 : i32
    %c0_i32_1 = arith.constant 0 : i32
    return %c0_i32, %c0_i32_0 : i32, i32
  }
  func.func @transform_2(%arg0: i32) -> (i32, i32) {
    %c0_i32 = arith.constant 0 : i32
    %c0_i32_0 = arith.constant 0 : i32
    %c0_i32_1 = arith.constant 0 : i32
    return %c0_i32, %c0_i32_0 : i32, i32
  }
  func.func @transform_3(%arg0: i32) -> (i32, i32) {
    %c0_i32 = arith.constant 0 : i32
    %c0_i32_0 = arith.constant 0 : i32
    %c0_i32_1 = arith.constant 0 : i32
    return %c0_i32, %c0_i32_0 : i32, i32
  }
  func.func @transform_4(%arg0: i32) -> (i32, i32) {
    %c0_i32 = arith.constant 0 : i32
    %c0_i32_0 = arith.constant 0 : i32
    return %arg0, %c0_i32 : i32, i32
  }
}

</mosaic_0001>

<llo_original>
// kernel: residual_block.1
$region0: #{residual_block.1}
  #allocation0 [shape = 'u32[]', space=smem, size = 0x4, offset = 0x4, fixed_abs, tag = 'smem constant byte address 0x4 - core index']
  #allocation1 [shape = 'u32[144,128]{1,0:T(1,128)}', space=vmem, size = 0x12000, scoped, tag = 'internal scratch']
  %s0 = inlined_call_operand.vmem [shape: bf16[8,128], index: 0, kind: input, shape index: {}]
  %s1 = inlined_call_operand.hbm [shape: bf16[128,256], index: 1, kind: input, shape index: {}]
  %s2 = inlined_call_operand.vmem [shape: f32[8,128], index: 2, kind: input, shape index: {}]
  %s3 = inlined_call_operand.hbm [shape: bf16[128,128], index: 3, kind: input, shape index: {}]
  %s4 = inlined_call_operand.hbm [shape: f32[8,128], index: 4, kind: output, shape index: {}]
  %s5 = sld [smem:[#allocation0]]
  $region34: #{residual_block.1} parent=0
    _
  %s7 = ssub.s32 1, %s5
  %s8 = scalar_select 0, %s7, %s5
  $region1: #{residual_block.1} parent=0
    #allocation2 [shape = 'u8[65536]{0}', space=vmem, size = 0x10000, scoped, tag = 'input window, operand 1, single buffered']
    #allocation3 [shape = 's32[1]{0}', space=sflag, size = 0x4, scoped, tag = 'scoped memory for residual_block.1']
    #allocation4 [shape = 's32[1]{0}', space=sflag, size = 0x4, scoped, tag = 'scoped memory for residual_block.1']
    #allocation5 [shape = 'u8[32768]{0}', space=vmem, size = 0x8000, scoped, tag = 'input window, operand 3, single buffered']
    #allocation6 [shape = 's32[1]{0}', space=sflag, size = 0x4, scoped, tag = 'scoped memory for residual_block.1']
    #allocation7 [shape = 'u8[4096]{0}', space=vmem, size = 0x1000, scoped, tag = 'output window, operand 0, single buffered']
    %9 = vsyncpa [#allocation3], 0
    %10 = vsyncpa [#allocation6], 0
    %11 = vsyncpa [#allocation4], 0
    // Predicated region
    $region2: #{residual_block.1} parent=1 // pred_check
      _
    $region3: #{residual_block.1} parent=1 // pred_check_branch
      %13 = sbr.rel (0) target = $region5
    $region4: #{residual_block.1} parent=1 // pred_region
      _
    $region5: #{residual_block.1} parent=1 // pred_fallthru
      _
    // Predicated region
    $region6: #{residual_block.1} parent=1 // pred_check
      _
    $region7: #{residual_block.1} parent=1 // pred_check_branch
      %15 = sbr.rel (0) target = $region9
    $region8: #{residual_block.1} parent=1 // pred_region
      %s17 = ssub.s32 2048, 2048
      %18 = vsyncadd [#allocation3], %s17
      %s19 = sshll.u32 [#allocation2], 4
      %s20 = int_to_ptr.vmem [resolvable:$true] %s19
      %25 = dma.hbm_to_vmem [thread:$0]  %s1, 2048, %s20, [#allocation3], 128, 128, 8
    $region9: #{residual_block.1} parent=1 // pred_fallthru
      _
    // Predicated region
    $region10: #{residual_block.1} parent=1 // pred_check
      _
    $region11: #{residual_block.1} parent=1 // pred_check_branch
      %27 = sbr.rel (0) target = $region13
    $region12: #{residual_block.1} parent=1 // pred_region
      _
    $region13: #{residual_block.1} parent=1 // pred_fallthru
      _
    // Predicated region
    $region14: #{residual_block.1} parent=1 // pred_check
      _
    $region15: #{residual_block.1} parent=1 // pred_check_branch
      %29 = sbr.rel (0) target = $region17
    $region16: #{residual_block.1} parent=1 // pred_region
      %s31 = ssub.s32 1024, 1024
      %32 = vsyncadd [#allocation6], %s31
      %s33 = sshll.u32 [#allocation5], 4
      %s34 = int_to_ptr.vmem [resolvable:$true] %s33
      %39 = dma.hbm_to_vmem [thread:$0]  %s3, 1024, %s34, [#allocation6], 64, 64, 4
    $region17: #{residual_block.1} parent=1 // pred_fallthru
      _
    // Predicated region
    $region18: #{residual_block.1} parent=1 // pred_check
      _
    $region19: #{residual_block.1} parent=1 // pred_check_branch
      %41 = sbr.rel (0) target = $region21
    $region20: #{residual_block.1} parent=1 // pred_region
      %42 = dma.done [#allocation3], 2048
    $region21: #{residual_block.1} parent=1 // pred_fallthru
      _
    // Predicated region
    $region22: #{residual_block.1} parent=1 // pred_check
      _
    $region23: #{residual_block.1} parent=1 // pred_check_branch
      %44 = sbr.rel (0) target = $region25
    $region24: #{residual_block.1} parent=1 // pred_region
      %45 = dma.done [#allocation6], 1024
    $region25: #{residual_block.1} parent=1 // pred_fallthru
      _
    %v47 = vld [vmem:[%s0] sm:$0xf]
    %v48 = vld [vmem:[%s2] sm:$0xff]
    %v49 = vld [vmem:[#allocation2] sm:$0xff]
    %v50 = vld [vmem:[#allocation2 + $0x8] sm:$0xff]
    %v51 = vld [vmem:[#allocation2 + $0x10] sm:$0xff]
    %v52 = vld [vmem:[#allocation2 + $0x18] sm:$0xff]
    %v53 = vld [vmem:[#allocation2 + $0x20] sm:$0xff]
    %v54 = vld [vmem:[#allocation2 + $0x28] sm:$0xff]
    %v55 = vld [vmem:[#allocation2 + $0x30] sm:$0xff]
    %v56 = vld [vmem:[#allocation2 + $0x38] sm:$0xff]
    %v57 = vld [vmem:[#allocation2 + $0x40] sm:$0xff]
    %v58 = vld [vmem:[#allocation2 + $0x48] sm:$0xff]
    %v59 = vld [vmem:[#allocation2 + $0x50] sm:$0xff]
    %v60 = vld [vmem:[#allocation2 + $0x58] sm:$0xff]
    %v61 = vld [vmem:[#allocation2 + $0x60] sm:$0xff]
    %v62 = vld [vmem:[#allocation2 + $0x68] sm:$0xff]
    %v63 = vld [vmem:[#allocation2 + $0x70] sm:$0xff]
    %v64 = vld [vmem:[#allocation2 + $0x78] sm:$0xff]
    %v81 = vunpack.c.l.b16 %v49
    %v82 = vunpack.c.h.b16 %v49
    %v83 = vunpack.c.l.b16 %v50
    %v84 = vunpack.c.h.b16 %v50
    %v85 = vunpack.c.l.b16 %v51
    %v86 = vunpack.c.h.b16 %v51
    %v87 = vunpack.c.l.b16 %v52
    %v88 = vunpack.c.h.b16 %v52
    %v89 = vunpack.c.l.b16 %v53
    %v90 = vunpack.c.h.b16 %v53
    %v91 = vunpack.c.l.b16 %v54
    %v92 = vunpack.c.h.b16 %v54
    %v93 = vunpack.c.l.b16 %v55
    %v94 = vunpack.c.h.b16 %v55
    %v95 = vunpack.c.l.b16 %v56
    %v96 = vunpack.c.h.b16 %v56
    %v97 = vunpack.c.l.b16 %v57
    %v98 = vunpack.c.h.b16 %v57
    %v99 = vunpack.c.l.b16 %v58
    %v100 = vunpack.c.h.b16 %v58
    %v101 = vunpack.c.l.b16 %v59
    %v102 = vunpack.c.h.b16 %v59
    %v103 = vunpack.c.l.b16 %v60
    %v104 = vunpack.c.h.b16 %v60
    %v105 = vunpack.c.l.b16 %v61
    %v106 = vunpack.c.h.b16 %v61
    %v107 = vunpack.c.l.b16 %v62
    %v108 = vunpack.c.h.b16 %v62
    %v109 = vunpack.c.l.b16 %v63
    %v110 = vunpack.c.h.b16 %v63
    %v111 = vunpack.c.l.b16 %v64
    %v112 = vunpack.c.h.b16 %v64
    %v113 = vpack.c.b16 %v83, %v81
    %v114 = vpack.c.b16 %v84, %v82
    %v115 = vpack.c.b16 %v87, %v85
    %v116 = vpack.c.b16 %v88, %v86
    %v117 = vpack.c.b16 %v91, %v89
    %v118 = vpack.c.b16 %v92, %v90
    %v119 = vpack.c.b16 %v95, %v93
    %v120 = vpack.c.b16 %v96, %v94
    %v121 = vpack.c.b16 %v99, %v97
    %v122 = vpack.c.b16 %v100, %v98
    %v123 = vpack.c.b16 %v103, %v101
    %v124 = vpack.c.b16 %v104, %v102
    %v125 = vpack.c.b16 %v107, %v105
    %v126 = vpack.c.b16 %v108, %v106
    %v127 = vpack.c.b16 %v111, %v109
    %v128 = vpack.c.b16 %v112, %v110
    %145 = vmatprep.subr.bf16.mxu0 %v114
    %146 = vmatpush1.bf16.msra.mxu0 %v113
    %147 = vmatprep.subr.bf16.mxu0 %v116
    %148 = vmatpush1.bf16.msra.mxu0 %v115
    %149 = vmatprep.subr.bf16.mxu0 %v118
    %150 = vmatpush1.bf16.msra.mxu0 %v117
    %151 = vmatprep.subr.bf16.mxu0 %v120
    %152 = vmatpush1.bf16.msra.mxu0 %v119
    %153 = vmatprep.subr.bf16.mxu0 %v122
    %154 = vmatpush1.bf16.msra.mxu0 %v121
    %155 = vmatprep.subr.bf16.mxu0 %v124
    %156 = vmatpush1.bf16.msra.mxu0 %v123
    %157 = vmatprep.subr.bf16.mxu0 %v126
    %158 = vmatpush1.bf16.msra.mxu0 %v125
    %159 = vmatprep.subr.bf16.mxu0 %v128
    %160 = vmatpush1.bf16.msra.mxu0 %v127
    %161 = vmatprep.subr.bf16.mxu0 0
    %162 = vmatpush1.bf16.msra.mxu0 0
    %163 = vmatprep.subr.bf16.mxu0 0
    %164 = vmatpush1.bf16.msra.mxu0 0
    %165 = vmatprep.subr.bf16.mxu0 0
    %166 = vmatpush1.bf16.msra.mxu0 0
    %167 = vmatprep.subr.bf16.mxu0 0
    %168 = vmatpush1.bf16.msra.mxu0 0
    %169 = vmatprep.subr.bf16.mxu0 0
    %170 = vmatpush1.bf16.msra.mxu0 0
    %171 = vmatprep.subr.bf16.mxu0 0
    %172 = vmatpush1.bf16.msra.mxu0 0
    %173 = vmatprep.subr.bf16.mxu0 0
    %174 = vmatpush1.bf16.msra.mxu0 0
    %175 = vmatprep.subr.bf16.mxu0 0
    %176 = vmatpush1.bf16.msra.mxu0 0
    %177 = vmatprep.mubr.bf16.mxu0 0
    %178 = vmatmul.mubr.bf16.gmra.mrb[0].mxu0 %v47
    %v179 = vpop.f32.mrb[0].mxu0
    %v180 = vadd.f32 0.0, %v179
    %v181 = vpop.f32.mrb[0].mxu0
    %v182 = vadd.f32 0.0, %v181
    %v183 = vpop.f32.mrb[0].mxu0
    %v184 = vpop.f32.mrb[0].mxu0
    %185 = vdwg.mxu0
    %v186 = vlaneseq
    %v187 = vshrl.u32 %v186, 7
    %v188 = vsub.s32 0, %v187
    %v189 = vrot.slane %v48, %v188
    %v190 = vadd.f32 %v180, %v189
    %v191 = vlaneseq
    %v192 = vshrl.u32 %v191, 7
    %v193 = vsub.s32 1, %v192
    %v194 = vrot.slane %v48, %v193
    %v195 = vadd.f32 %v182, %v194
    %196 = vadd.xlane.f32.xlu0 %v190
    %v197 = vpop.xlane.xlu0 %196
    %v198 = vmul.f32 %v197, 0.015625
    %v199 = vmul.f32 %v190, %v190
    %200 = vadd.xlane.f32.xlu0 %v199
    %v201 = vpop.xlane.xlu0 %200
    %v202 = vmul.f32 %v201, 0.015625
    %v203 = vmul.f32 %v198, %v198
    %v204 = vsub.f32 %v202, %v203
    %v205 = vmax.f32 %v204, 0.0
    %v206 = vsub.f32 %v190, %v198
    %v207 = vadd.f32 %v205, 1e-05
    %v208 = vrsqrt.pop %v207
    %v209 = vmul.f32 %v206, %v208
    %v210 = vlaneseq
    %v211 = vshrl.u32 %v210, 7
    %v212 = vsub.s32 2, %v211
    %v213 = vrot.slane %v48, %v212
    %v214 = vmul.f32 %v209, %v213
    %v215 = vlaneseq
    %v216 = vshrl.u32 %v215, 7
    %v217 = vsub.s32 3, %v216
    %v218 = vrot.slane %v48, %v217
    %v219 = vadd.f32 %v214, %v218
    %vm220 = vcmp.gt.f32.partialorder %v219, 0.0
    %v221 = vmul.f32 %v219, 0.2
    %v222 = vsel %vm220, %v219, %v221
    %v223 = vpack.c.bf16 %v222, %v222
    %v224 = vld [vmem:[#allocation5] sm:$0xf]
    %v225 = vld [vmem:[#allocation5 + $0x4] sm:$0xf]
    %v226 = vld [vmem:[#allocation5 + $0x8] sm:$0xf]
    %v227 = vld [vmem:[#allocation5 + $0xc] sm:$0xf]
    %v228 = vld [vmem:[#allocation5 + $0x10] sm:$0xf]
    %v229 = vld [vmem:[#allocation5 + $0x14] sm:$0xf]
    %v230 = vld [vmem:[#allocation5 + $0x18] sm:$0xf]
    %v231 = vld [vmem:[#allocation5 + $0x1c] sm:$0xf]
    %v232 = vld [vmem:[#allocation5 + $0x20] sm:$0xf]
    %v233 = vld [vmem:[#allocation5 + $0x24] sm:$0xf]
    %v234 = vld [vmem:[#allocation5 + $0x28] sm:$0xf]
    %v235 = vld [vmem:[#allocation5 + $0x2c] sm:$0xf]
    %v236 = vld [vmem:[#allocation5 + $0x30] sm:$0xf]
    %v237 = vld [vmem:[#allocation5 + $0x34] sm:$0xf]
    %v238 = vld [vmem:[#allocation5 + $0x38] sm:$0xf]
    %v239 = vld [vmem:[#allocation5 + $0x3c] sm:$0xf]
    %v240 = vlaneseq
    %v241 = vshrl.u32 %v240, 7
    %v242 = vsub.s32 4, %v241
    %v243 = vrot.slane %v48, %v242
    %v260 = vunpack.c.l.b16 %v224
    %v261 = vunpack.c.l.b16 %v225
    %v262 = vunpack.c.l.b16 %v226
    %v263 = vunpack.c.l.b16 %v227
    %v264 = vunpack.c.l.b16 %v228
    %v265 = vunpack.c.l.b16 %v229
    %v266 = vunpack.c.l.b16 %v230
    %v267 = vunpack.c.l.b16 %v231
    %v268 = vunpack.c.l.b16 %v232
    %v269 = vunpack.c.l.b16 %v233
    %v270 = vunpack.c.l.b16 %v234
    %v271 = vunpack.c.l.b16 %v235
    %v272 = vunpack.c.l.b16 %v236
    %v273 = vunpack.c.l.b16 %v237
    %v274 = vunpack.c.l.b16 %v238
    %v275 = vunpack.c.l.b16 %v239
    %v276 = vpack.c.b16 %v261, %v260
    %v277 = vpack.c.b16 %v263, %v262
    %v278 = vpack.c.b16 %v265, %v264
    %v279 = vpack.c.b16 %v267, %v266
    %v280 = vpack.c.b16 %v269, %v268
    %v281 = vpack.c.b16 %v271, %v270
    %v282 = vpack.c.b16 %v273, %v272
    %v283 = vpack.c.b16 %v275, %v274
    %292 = vmatprep.subr.bf16.mxu0 0
    %293 = vmatpush1.bf16.msra.mxu0 %v276
    %294 = vmatprep.subr.bf16.mxu0 0
    %295 = vmatpush1.bf16.msra.mxu0 %v277
    %296 = vmatprep.subr.bf16.mxu0 0
    %297 = vmatpush1.bf16.msra.mxu0 %v278
    %298 = vmatprep.subr.bf16.mxu0 0
    %299 = vmatpush1.bf16.msra.mxu0 %v279
    %300 = vmatprep.subr.bf16.mxu0 0
    %301 = vmatpush1.bf16.msra.mxu0 %v280
    %302 = vmatprep.subr.bf16.mxu0 0
    %303 = vmatpush1.bf16.msra.mxu0 %v281
    %304 = vmatprep.subr.bf16.mxu0 0
    %305 = vmatpush1.bf16.msra.mxu0 %v282
    %306 = vmatprep.subr.bf16.mxu0 0
    %307 = vmatpush1.bf16.msra.mxu0 %v283
    %308 = vmatprep.subr.bf16.mxu0 0
    %309 = vmatpush1.bf16.msra.mxu0 0
    %310 = vmatprep.subr.bf16.mxu0 0
    %311 = vmatpush1.bf16.msra.mxu0 0
    %312 = vmatprep.subr.bf16.mxu0 0
    %313 = vmatpush1.bf16.msra.mxu0 0
    %314 = vmatprep.subr.bf16.mxu0 0
    %315 = vmatpush1.bf16.msra.mxu0 0
    %316 = vmatprep.subr.bf16.mxu0 0
    %317 = vmatpush1.bf16.msra.mxu0 0
    %318 = vmatprep.subr.bf16.mxu0 0
    %319 = vmatpush1.bf16.msra.mxu0 0
    %320 = vmatprep.subr.bf16.mxu0 0
    %321 = vmatpush1.bf16.msra.mxu0 0
    %322 = vmatprep.subr.bf16.mxu0 0
    %323 = vmatpush1.bf16.msra.mxu0 0
    %324 = vmatprep.mubr.bf16.mxu0 0
    %325 = vmatmul.mubr.bf16.gmra.mrb[0].mxu0 %v223
    %v326 = vpop.f32.mrb[0].mxu0
    %v327 = vadd.f32 %v243, %v326
    %v328 = vpop.f32.mrb[0].mxu0
    %v329 = vpop.f32.mrb[0].mxu0
    %v330 = vpop.f32.mrb[0].mxu0
    %331 = vdwg.mxu0
    %332 = vadd.xlane.f32.xlu0 %v327
    %v333 = vpop.xlane.xlu0 %332
    %v334 = vmul.f32 %v333, 0.015625
    %v335 = vmul.f32 %v327, %v327
    %336 = vadd.xlane.f32.xlu0 %v335
    %v337 = vpop.xlane.xlu0 %336
    %v338 = vmul.f32 %v337, 0.015625
    %v339 = vmul.f32 %v334, %v334
    %v340 = vsub.f32 %v338, %v339
    %v341 = vmax.f32 %v340, 0.0
    %v342 = vsub.f32 %v327, %v334
    %v343 = vadd.f32 %v341, 1e-05
    %v344 = vrsqrt.pop %v343
    %v345 = vmul.f32 %v342, %v344
    %v346 = vlaneseq
    %v347 = vshrl.u32 %v346, 7
    %v348 = vsub.s32 5, %v347
    %v349 = vrot.slane %v48, %v348
    %v350 = vmul.f32 %v345, %v349
    %v351 = vlaneseq
    %v352 = vshrl.u32 %v351, 7
    %v353 = vsub.s32 6, %v352
    %v354 = vrot.slane %v48, %v353
    %v355 = vadd.f32 %v350, %v354
    %v356 = vadd.f32 %v355, %v195
    %vm357 = vcmp.gt.f32.partialorder %v356, 0.0
    %v358 = vmul.f32 %v356, 0.2
    %v359 = vsel %vm357, %v356, %v358
    %360 = vst [vmem:[#allocation7] sm:$0xff] %v359
    // Predicated region
    $region26: #{residual_block.1} parent=1 // pred_check
      _
    $region27: #{residual_block.1} parent=1 // pred_check_branch
      %362 = sbr.rel (0) target = $region29
    $region28: #{residual_block.1} parent=1 // pred_region
      %s364 = ssub.s32 128, 128
      %365 = vsyncadd [#allocation4], %s364
      %s367 = sshll.u32 [#allocation7], 4
      %s368 = int_to_ptr.vmem [resolvable:$true] %s367
      %370 = dma.vmem_to_hbm [thread:$0]  %s368, 128, %s4, [#allocation4]
    $region29: #{residual_block.1} parent=1 // pred_fallthru
      _
    // Predicated region
    $region30: #{residual_block.1} parent=1 // pred_check
      _
    $region31: #{residual_block.1} parent=1 // pred_check_branch
      %372 = sbr.rel (0) target = $region33
    $region32: #{residual_block.1} parent=1 // pred_region
      %373 = dma.done [#allocation4], 128
    $region33: #{residual_block.1} parent=1 // pred_fallthru
      _
    %374 = vsyncpa [#allocation3], 1
    %375 = vsyncpa [#allocation6], 1
    %376 = vsyncpa [#allocation4], 1

</llo_original>
